<compile_context>
chip_gen: v7x
topology: tpu7x:2x2x1
jax: 0.10.0
libtpu: 0.0.40
codegen_flags: <defaults>
</compile_context>

<pallas_src>
import jax
import jax.numpy as jnp
from jax.experimental import pallas as pl
from jax.experimental.pallas import tpu as pltpu

EPS = 1e-5                        # nn.BatchNorm2d default
_MAX_BLOCK_ELEMS = 1 << 20        # ~4 MiB of f32 per block buffer
_VMEM_LIMIT = 32 * 1024 * 1024    # raises v5e default, == v6e/v7x default, < v7x physical


def _stats_kernel(x_ref, s1_ref, s2_ref):
    """Accumulate per (ghost-group, channel) sum and sum-of-squares.

    x_ref : (nb_tile, gc_tile, hw_tile)
    s1/s2 : (gc_tile, 1) resident accumulators (same output block across reduction axes).
    """
    i = pl.program_id(1)   # Nb reduction index
    k = pl.program_id(2)   # HW reduction index

    @pl.when(jnp.logical_and(i == 0, k == 0))
    def _():
        s1_ref[...] = jnp.zeros_like(s1_ref)
        s2_ref[...] = jnp.zeros_like(s2_ref)

    x = x_ref[...].astype(jnp.float32)
    xs = jnp.sum(x, axis=0)            # (gc_tile, hw_tile)
    x2s = jnp.sum(x * x, axis=0)       # (gc_tile, hw_tile)
    s1_ref[...] += jnp.sum(xs, axis=-1, keepdims=True)
    s2_ref[...] += jnp.sum(x2s, axis=-1, keepdims=True)


def _apply_kernel(x_ref, a_ref, b_ref, o_ref):
    """Fused normalize + affine: y = x * a + b (one FMA per element)."""
    x = x_ref[...].astype(jnp.float32)
    o_ref[...] = (x * a_ref[...] + b_ref[...]).astype(o_ref.dtype)


def _largest_divisor(extent, cap):
    cap = max(1, min(int(cap), int(extent)))
    for t in range(cap, 0, -1):
        if extent % t == 0:
            return t
    return 1


def _pick_hw_tile(hw, cap=2048):
    """Largest multiple of 128 that divides hw (<= cap); else full extent."""
    best = None
    t = 128
    while t <= min(cap, hw):
        if hw % t == 0:
            best = t
        t += 128
    return best if best is not None else hw


def fourbn_forward(x, aff_w, aff_b, *, ratio=2):
    """FourBN forward (training-mode GhostBN 'bn0' + Affine 1x1 depthwise conv).

    x: (N, C, H, W).  aff_w: (C,1,1,1) depthwise conv weight.  aff_b: (C,) bias.
    """
    N, C, H, W = x.shape
    if N % ratio != 0:
        raise ValueError("batch must be divisible by virtual2actual_batch_size_ratio")
    Nb = N // ratio
    GC = ratio * C
    HW = H * W

    # Free reshape, no HBM transpose: (N,C,H,W) == (Nb, ratio*C, H*W) in row-major memory.
    x3 = x.reshape(Nb, GC, HW)

    # --- tile selection ---------------------------------------------------
    gc_tile = 8 if GC % 8 == 0 else GC
    hw_tile = _pick_hw_tile(HW)
    nb_budget = max(1, _MAX_BLOCK_ELEMS // (gc_tile * hw_tile))
    if GC // gc_tile < 2 and Nb >= 2:
        # keep >= 2 parallel grid iterations so both v7x TensorCores get work
        nb_budget = min(nb_budget, Nb // 2)
    nb_tile = _largest_divisor(Nb, nb_budget)

    grid = (GC // gc_tile, Nb // nb_tile, HW // hw_tile)
    x_spec = pl.BlockSpec((nb_tile, gc_tile, hw_tile), lambda j, i, k: (i, j, k))

    # --- pass 1: per proxy-channel sum / sum-of-squares --------------------
    s1, s2 = pl.pallas_call(
        _stats_kernel,
        out_shape=(jax.ShapeDtypeStruct((GC, 1), jnp.float32),
                   jax.ShapeDtypeStruct((GC, 1), jnp.float32)),
        grid_spec=pltpu.PrefetchScalarGridSpec(
            num_scalar_prefetch=0,
            grid=grid,
            in_specs=[x_spec],
            out_specs=(pl.BlockSpec((gc_tile, 1), lambda j, i, k: (j, 0)),
                       pl.BlockSpec((gc_tile, 1), lambda j, i, k: (j, 0))),
        ),
        compiler_params=pltpu.CompilerParams(
            dimension_semantics=("parallel", "arbitrary", "arbitrary"),
            vmem_limit_bytes=_VMEM_LIMIT,
        ),
    )(x3)

    # --- tiny per-channel math (GC elements) -------------------------------
    count = jnp.float32(Nb * HW)
    mean = s1[:, 0] / count
    var = jnp.maximum(s2[:, 0] / count - mean * mean, 0.0)   # biased var, clamped >= 0
    inv = jax.lax.rsqrt(var + EPS)
    scale = jnp.tile(aff_w.reshape(C).astype(jnp.float32), (ratio,))  # row j -> chan j % C
    bias = jnp.tile(aff_b.reshape(C).astype(jnp.float32), (ratio,))
    a = (inv * scale).reshape(1, GC, 1)
    b = (bias - mean * inv * scale).reshape(1, GC, 1)

    # --- pass 2: fused normalize + affine (pure FMA, HBM-bandwidth bound) ---
    ab_spec = pl.BlockSpec((1, gc_tile, 1), lambda j, i, k: (0, j, 0))
    out3 = pl.pallas_call(
        _apply_kernel,
        out_shape=jax.ShapeDtypeStruct((Nb, GC, HW), x.dtype),
        grid_spec=pltpu.PrefetchScalarGridSpec(
            num_scalar_prefetch=0,
            grid=grid,
            in_specs=[x_spec, ab_spec, ab_spec],
            out_specs=x_spec,
        ),
        compiler_params=pltpu.CompilerParams(
            dimension_semantics=("parallel", "parallel", "parallel"),
            vmem_limit_bytes=_VMEM_LIMIT,
        ),
    )(x3, a, b)

    return out3.reshape(N, C, H, W)


def fourbn_reference(x, aff_w, aff_b, *, ratio=2):
    """Pure-JAX reference mirroring the PyTorch forward (training mode, bn_type='bn0')."""
    N, C, H, W = x.shape
    Nb = N // ratio
    px = x.reshape(Nb, ratio * C, H, W)
    mean = px.mean(axis=(0, 2, 3), keepdims=True)
    var = px.var(axis=(0, 2, 3), keepdims=True)   # biased, as BN uses for normalization
    pnorm = (px - mean) / jnp.sqrt(var + EPS)
    y = pnorm.reshape(N, C, H, W)
    return y * aff_w.reshape(1, C, 1, 1) + aff_b.reshape(1, C, 1, 1)


if __name__ == "__main__":
    # Small shapes consistent with the module: NCHW input, C = num_features.
    N, C, H, W = 4, 4, 16, 16
    ratio = 2

    key = jax.random.PRNGKey(0)
    kx, kw, kb = jax.random.split(key, 3)
    x = jax.random.normal(kx, (N, C, H, W), dtype=jnp.float32)

    # Affine = nn.Conv2d(C, C, 1, groups=C, bias=True): weight (C,1,1,1), bias (C,)
    aff_w = jax.random.normal(kw, (C, 1, 1, 1), dtype=jnp.float32) * 0.5 + 1.0
    aff_b = jax.random.normal(kb, (C,), dtype=jnp.float32) * 0.1

    # GhostBN2D_Old(affine=False) has no learned parameters in the training-mode forward.
    # TODO(synk): eval-mode branch (F.batch_norm with actual running stats) not implemented.

    out = fourbn_forward(x, aff_w, aff_b, ratio=ratio)
    out = jax.block_until_ready(out)

    ref = fourbn_reference(x, aff_w, aff_b, ratio=ratio)
    assert out.shape == (N, C, H, W)
    assert jnp.allclose(out, ref, atol=1e-4, rtol=1e-4)

    print("KERNEL_OK")
</pallas_src>

<mosaic_0001>
module attributes {stable_mosaic.version = 11 : i64} {
  func.func @_stats_kernel(%arg0: i32, %arg1: i32, %arg2: i32, %arg3: memref<1x8x256xf32, #tpu.memory_space<vmem>>, %arg4: memref<8x1xf32, #tpu.memory_space<vmem>>, %arg5: memref<8x1xf32, #tpu.memory_space<vmem>>) attributes {dimension_semantics = [#tpu.dimension_semantics<parallel>, #tpu.dimension_semantics<arbitrary>, #tpu.dimension_semantics<arbitrary>], iteration_bounds = array<i64: 1, 2, 1>, scalar_prefetch = 0 : i64, scratch_operands = 0 : i64, tpu.core_type = #tpu.core_type<tc>, window_params = [{transform_indices = @transform_0, window_bounds = array<i64: 1, 8, 256>}, {transform_indices = @transform_1, window_bounds = array<i64: 8, 1>}, {transform_indices = @transform_2, window_bounds = array<i64: 8, 1>}]} {
    %c0_i32 = arith.constant 0 : i32
    %0 = arith.cmpi eq, %arg1, %c0_i32 : i32
    %c0_i32_0 = arith.constant 0 : i32
    %1 = arith.cmpi eq, %arg2, %c0_i32_0 : i32
    %2 = arith.andi %0, %1 : i1
    %3 = arith.extui %2 : i1 to i32
    %c0_i32_1 = arith.constant 0 : i32
    %4 = arith.cmpi ne, %3, %c0_i32_1 : i32
    scf.if %4 {
      %cst_15 = arith.constant 0.000000e+00 : f32
      %19 = vector.broadcast %cst_15 : f32 to vector<8x1xf32>
      %c0_16 = arith.constant 0 : index
      %c0_17 = arith.constant 0 : index
      %20 = vector.load %arg4[%c0_16, %c0_17] : memref<8x1xf32, #tpu.memory_space<vmem>>, vector<8x1xf32>
      tpu.vector_store %arg4[%c0_16, %c0_17], %19 {strides = array<i32>} : memref<8x1xf32, #tpu.memory_space<vmem>>, vector<8x1xf32>,
      %cst_18 = arith.constant 0.000000e+00 : f32
      %21 = vector.broadcast %cst_18 : f32 to vector<8x1xf32>
      %c0_19 = arith.constant 0 : index
      %c0_20 = arith.constant 0 : index
      %22 = vector.load %arg5[%c0_19, %c0_20] : memref<8x1xf32, #tpu.memory_space<vmem>>, vector<8x1xf32>
      tpu.vector_store %arg5[%c0_19, %c0_20], %21 {strides = array<i32>} : memref<8x1xf32, #tpu.memory_space<vmem>>, vector<8x1xf32>,
    } else {
    }
    %c0 = arith.constant 0 : index
    %c0_2 = arith.constant 0 : index
    %c0_3 = arith.constant 0 : index
    %5 = vector.load %arg3[%c0, %c0_2, %c0_3] : memref<1x8x256xf32, #tpu.memory_space<vmem>>, vector<1x8x256xf32>
    %cst = arith.constant dense<0.000000e+00> : vector<8x256xf32>
    %6 = vector.multi_reduction <add>, %5, %cst [0] : vector<1x8x256xf32> to vector<8x256xf32>
    %7 = arith.mulf %5, %5 : vector<1x8x256xf32>
    %cst_4 = arith.constant dense<0.000000e+00> : vector<8x256xf32>
    %8 = vector.multi_reduction <add>, %7, %cst_4 [0] : vector<1x8x256xf32> to vector<8x256xf32>
    %c0_5 = arith.constant 0 : index
    %c0_6 = arith.constant 0 : index
    %9 = vector.load %arg4[%c0_5, %c0_6] : memref<8x1xf32, #tpu.memory_space<vmem>>, vector<8x1xf32>
    %cst_7 = arith.constant dense<0.000000e+00> : vector<8xf32>
    %10 = vector.multi_reduction <add>, %6, %cst_7 [1] : vector<8x256xf32> to vector<8xf32>
    %11 = vector.shape_cast %10 : vector<8xf32> to vector<8x1xf32>
    %12 = arith.addf %9, %11 : vector<8x1xf32>
    %c0_8 = arith.constant 0 : index
    %c0_9 = arith.constant 0 : index
    %13 = vector.load %arg4[%c0_8, %c0_9] : memref<8x1xf32, #tpu.memory_space<vmem>>, vector<8x1xf32>
    tpu.vector_store %arg4[%c0_8, %c0_9], %12 {strides = array<i32>} : memref<8x1xf32, #tpu.memory_space<vmem>>, vector<8x1xf32>,
    %c0_10 = arith.constant 0 : index
    %c0_11 = arith.constant 0 : index
    %14 = vector.load %arg5[%c0_10, %c0_11] : memref<8x1xf32, #tpu.memory_space<vmem>>, vector<8x1xf32>
    %cst_12 = arith.constant dense<0.000000e+00> : vector<8xf32>
    %15 = vector.multi_reduction <add>, %8, %cst_12 [1] : vector<8x256xf32> to vector<8xf32>
    %16 = vector.shape_cast %15 : vector<8xf32> to vector<8x1xf32>
    %17 = arith.addf %14, %16 : vector<8x1xf32>
    %c0_13 = arith.constant 0 : index
    %c0_14 = arith.constant 0 : index
    %18 = vector.load %arg5[%c0_13, %c0_14] : memref<8x1xf32, #tpu.memory_space<vmem>>, vector<8x1xf32>
    tpu.vector_store %arg5[%c0_13, %c0_14], %17 {strides = array<i32>} : memref<8x1xf32, #tpu.memory_space<vmem>>, vector<8x1xf32>,
    return
  }
  func.func @transform_0(%arg0: i32, %arg1: i32, %arg2: i32) -> (i32, i32, i32) {
    %c0_i32 = arith.constant 0 : i32
    return %arg1, %arg0, %arg2 : i32, i32, i32
  }
  func.func @transform_1(%arg0: i32, %arg1: i32, %arg2: i32) -> (i32, i32) {
    %c0_i32 = arith.constant 0 : i32
    %c0_i32_0 = arith.constant 0 : i32
    return %arg0, %c0_i32 : i32, i32
  }
  func.func @transform_2(%arg0: i32, %arg1: i32, %arg2: i32) -> (i32, i32) {
    %c0_i32 = arith.constant 0 : i32
    %c0_i32_0 = arith.constant 0 : i32
    return %arg0, %c0_i32 : i32, i32
  }
}

</mosaic_0001>

<llo_original>
// kernel: tpu_custom_call.1
$region0: #{tpu_custom_call.1}
  #allocation0 [shape = 'u32[]', space=smem, size = 0x4, offset = 0x4, fixed_abs, tag = 'smem constant byte address 0x4 - core index']
  #allocation1 [shape = 'u32[144,128]{1,0:T(1,128)}', space=vmem, size = 0x12000, scoped, tag = 'internal scratch']
  %s0 = inlined_call_operand.hbm [shape: f32[2,8,256], index: 0, kind: input, shape index: {}]
  %s1 = inlined_call_operand.vmem [shape: f32[8,1], index: 1, kind: output, shape index: {0}]
  %s2 = inlined_call_operand.vmem [shape: f32[8,1], index: 2, kind: output, shape index: {1}]
  %3 = xla_tuple %s1, %s2
  %s4 = sld [smem:[#allocation0]]
  $region53: #{tpu_custom_call.1} parent=0
    _
  %s6 = ssub.s32 1, %s4
  %s7 = scalar_select 0, %s6, %s4
  $region1: #{tpu_custom_call.1} parent=0
    #allocation2 [shape = 'u8[16384]{0}', space=vmem, size = 0x4000, scoped, tag = 'input window, operand 0']
    #allocation3 [shape = 's32[2]{0}', space=sflag, size = 0x8, scoped, tag = 'scoped memory for tpu_custom_call.1']
    %8 = vsyncpa [#allocation3], 0
    %s9 = scalar_lea.sflag [#allocation3], 1
    %10 = vsyncpa %s9, 0
    loop: start=0, step=1, limit=4
    $region2: #{tpu_custom_call.1} parent=1 // loop_pre_header
      _
    $region3: #{tpu_custom_call.1} parent=1 // loop_header
      %s12 = sphi 0, %s16
      %p13 = scmp.ge.s32.totalorder %s12, 4
      %s19 = sphi 0, %s38
      %s20 = sphi 0, %s34
      %s21 = sphi 0, %s30
      %s22 = sphi 0, %s19
      %s23 = sphi 0, %s20
      %s24 = sphi 0, %s21
      %s25 = sphi 0, %s22
      %s26 = sphi 0, %s23
      %s27 = sphi 0, %s24
      %s45 = sphi 0, %s47
      %s48 = sphi 0, %s45
      %s49 = sphi 0, %s48
      %s65 = sphi 0, %s49
      %s71 = sphi 0, %s73
      %s74 = sphi 0, %s71
      %s75 = sphi 0, %s74
      %s91 = sphi 0, %s75
      %s97 = sphi 0, %s99
      %s100 = sphi 0, %s97
      %s101 = sphi 0, %s100
      %s117 = sphi 0, %s101
    $region4: #{tpu_custom_call.1} parent=1 // loop_header_branch
      %15 = sbr.rel (%p13) target = $region8
    $region5: #{tpu_custom_call.1} parent=1 // loop_body
      %s17 = ssub.s32 %s12, 1
      %s18 = ssub.s32 %s12, 2
      %s28 = sadd.s32 1, %s21
      %p29 = scmp.ge.s32.totalorder %s28, 1
      %s30 = scalar_select %p29, 0, %s28
      %s31 = sadd.s32 1, %s20
      %s32 = scalar_select %p29, %s31, %s20
      %p33 = scmp.ge.s32.totalorder %s32, 2
      %s34 = scalar_select %p33, 0, %s32
      %s35 = sadd.s32 1, %s19
      %s36 = scalar_select %p33, %s35, %s19
      %p37 = scmp.ge.s32.totalorder %s36, 1
      %s38 = scalar_select %p37, 0, %s36
      %s39 = ssub.s32 %s20, %s34
      %s40 = ssub.s32 %s19, %s38
      %s41 = sor.u32 %s39, %s40
      %s42 = ssub.s32 %s21, %s30
      %s43 = sor.u32 %s41, %s42
      %p44 = scmp.eq.s32.totalorder %s43, 0
      %s46 = sadd.s32 %s45, 1
      %s47 = scalar_select %p44, %s45, %s46
      %p50 = pneg %p44
      %p51 = scmp.eq.s32.totalorder %s12, 1
      %p52 = por %p50, %p51
      %p53 = scmp.ne.s32.totalorder %s45, %s48
      %p54 = scmp.eq.s32.totalorder %s12, 0
      %p55 = por %p53, %p54
      %p56 = scmp.ne.s32.totalorder %s45, %s48
      %p57 = scmp.eq.s32.totalorder %s17, 1
      %p58 = por %p56, %p57
      %p59 = scmp.ne.s32.totalorder %s48, %s49
      %p60 = scmp.eq.s32.totalorder %s17, 0
      %p61 = por %p59, %p60
      %p62 = scmp.ne.s32.totalorder %s48, %s49
      %p63 = scmp.eq.s32.totalorder %s18, 1
      %p64 = por %p62, %p63
      %p66 = scmp.ne.s32.totalorder %s49, %s65
      %p67 = scmp.eq.s32.totalorder %s18, 0
      %p68 = por %p66, %p67
      %s69 = ssub.s32 %s19, %s38
      %p70 = scmp.eq.s32.totalorder %s69, 0
      %s72 = sadd.s32 %s71, 1
      %s73 = scalar_select %p70, %s71, %s72
      %p76 = pneg %p70
      %p77 = scmp.eq.s32.totalorder %s12, 1
      %p78 = por %p76, %p77
      %p79 = scmp.ne.s32.totalorder %s71, %s74
      %p80 = scmp.eq.s32.totalorder %s12, 0
      %p81 = por %p79, %p80
      %p82 = scmp.ne.s32.totalorder %s71, %s74
      %p83 = scmp.eq.s32.totalorder %s17, 1
      %p84 = por %p82, %p83
      %p85 = scmp.ne.s32.totalorder %s74, %s75
      %p86 = scmp.eq.s32.totalorder %s17, 0
      %p87 = por %p85, %p86
      %p88 = scmp.ne.s32.totalorder %s74, %s75
      %p89 = scmp.eq.s32.totalorder %s18, 1
      %p90 = por %p88, %p89
      %p92 = scmp.ne.s32.totalorder %s75, %s91
      %p93 = scmp.eq.s32.totalorder %s18, 0
      %p94 = por %p92, %p93
      %s95 = ssub.s32 %s19, %s38
      %p96 = scmp.eq.s32.totalorder %s95, 0
      %s98 = sadd.s32 %s97, 1
      %s99 = scalar_select %p96, %s97, %s98
      %p102 = pneg %p96
      %p103 = scmp.eq.s32.totalorder %s12, 1
      %p104 = por %p102, %p103
      %p105 = scmp.ne.s32.totalorder %s97, %s100
      %p106 = scmp.eq.s32.totalorder %s12, 0
      %p107 = por %p105, %p106
      %p108 = scmp.ne.s32.totalorder %s97, %s100
      %p109 = scmp.eq.s32.totalorder %s17, 1
      %p110 = por %p108, %p109
      %p111 = scmp.ne.s32.totalorder %s100, %s101
      %p112 = scmp.eq.s32.totalorder %s17, 0
      %p113 = por %p111, %p112
      %p114 = scmp.ne.s32.totalorder %s100, %s101
      %p115 = scmp.eq.s32.totalorder %s18, 1
      %p116 = por %p114, %p115
      %p118 = scmp.ne.s32.totalorder %s101, %s117
      %p119 = scmp.eq.s32.totalorder %s18, 0
      %p120 = por %p118, %p119
      %p121 = scmp.le.s32.totalorder 1, %s12
      %p122 = scmp.lt.s32.totalorder %s12, 3
      %p123 = pnand %p121, %p122
      %p124 = pneg %p123
      // Predicated region
      $region9: #{tpu_custom_call.1} parent=5 // pred_check
        _
      $region10: #{tpu_custom_call.1} parent=5 // pred_check_branch
        %126 = sbr.rel (%p123) target = $region12
      $region11: #{tpu_custom_call.1} parent=5 // pred_region
        %s127 = ssub.s32 %s12, 1
      $region12: #{tpu_custom_call.1} parent=5 // pred_fallthru
        _
      %p128 = scmp.lt.s32.totalorder %s12, 2
      // Predicated region
      $region13: #{tpu_custom_call.1} parent=5 // pred_check
        %p129 = pneg %p128
      $region14: #{tpu_custom_call.1} parent=5 // pred_check_branch
        %131 = sbr.rel (%p129) target = $region16
      $region15: #{tpu_custom_call.1} parent=5 // pred_region
        // Predicated region
        $region17: #{tpu_custom_call.1} parent=15 // pred_check
          %p132 = pneg %p55
        $region18: #{tpu_custom_call.1} parent=15 // pred_check_branch
          %134 = sbr.rel (%p132) target = $region20
        $region19: #{tpu_custom_call.1} parent=15 // pred_region
          %s135 = sand.u32 %s45, 1
          %s136 = scalar_lea.sflag [#allocation3], %s135
          %s137 = sand.u32 %s45, 1
          %s138 = smul.addr %s137, 16
          %s139 = scalar_lea.vmem [#allocation2], %s138
          %s140 = smul.u32 2, %s21
          %s142 = ssub.s32 256, 256
          %143 = vsyncadd %s136, %s142
          %s144 = smul.addr %s19, 2
          %s145 = sadd.s32 %s140, %s144
          %s146 = smul.addr %s20, 2
          %s147 = sadd.s32 %s145, %s146
          %s148 = smul.addr %s147, 128
          %s149 = scalar_lea.hbm %s0, %s148
          %s151 = sshll.u32 %s139, 4
          %s152 = int_to_ptr.vmem [resolvable:$true] %s151
          %154 = dma.hbm_to_vmem [thread:$0]  %s149, 256, %s152, %s136
        $region20: #{tpu_custom_call.1} parent=15 // pred_fallthru
          _
      $region16: #{tpu_custom_call.1} parent=5 // pred_fallthru
        _
      %p155 = scmp.le.s32.totalorder 1, %s12
      %p156 = scmp.lt.s32.totalorder %s12, 3
      %p157 = pnand %p155, %p156
      %p158 = pneg %p157
      // Predicated region
      $region21: #{tpu_custom_call.1} parent=5 // pred_check
        _
      $region22: #{tpu_custom_call.1} parent=5 // pred_check_branch
        %160 = sbr.rel (%p157) target = $region24
      $region23: #{tpu_custom_call.1} parent=5 // pred_region
        %s161 = ssub.s32 %s12, 1
        %s162 = sand.u32 %s48, 1
        %s163 = scalar_lea.sflag [#allocation3], %s162
        %s164 = sand.u32 %s48, 1
        %s165 = smul.addr %s164, 16
        %s166 = scalar_lea.vmem [#allocation2], %s165
        // Predicated region
        $region25: #{tpu_custom_call.1} parent=23 // pred_check
          %p167 = pneg %p61
        $region26: #{tpu_custom_call.1} parent=23 // pred_check_branch
          %169 = sbr.rel (%p167) target = $region28
        $region27: #{tpu_custom_call.1} parent=23 // pred_region
          %170 = dma.done %s163, 256
        $region28: #{tpu_custom_call.1} parent=23 // pred_fallthru
          _
        %s171 = sand.u32 %s48, 1
        %s172 = scalar_lea.sflag [#allocation3], %s171
        %s173 = sand.u32 %s48, 1
        %s174 = smul.addr %s173, 16
        %s175 = scalar_lea.vmem [#allocation2], %s174
        %p176 = pneg %p61
        %p177 = pneg %p58
        %p178 = pneg %p87
        %p179 = pneg %p84
        %p180 = scmp.lt.s32.totalorder %s22, 0
        %s181 = scalar_select %p180, %s22, 0
        %s182 = smul.addr %s181, 8
        %s183 = scalar_lea.vmem %s1, %s182
        %p184 = pneg %p113
        %p185 = pneg %p110
        %p186 = scmp.lt.s32.totalorder %s22, 0
        %s187 = scalar_select %p186, %s22, 0
        %s188 = smul.addr %s187, 8
        %s189 = scalar_lea.vmem %s2, %s188
        %s190 = smul.u32 2, %s24
        %p191 = scmp.lt.s32.totalorder %s22, 0
        %s192 = scalar_select %p191, %s22, 0
        %s193 = smul.addr %s192, 8
        %s194 = scalar_lea.vmem %s1, %s193
        %p195 = scmp.lt.s32.totalorder %s22, 0
        %s196 = scalar_select %p195, %s22, 0
        %s197 = smul.addr %s196, 8
        %s198 = scalar_lea.vmem %s2, %s197
        %p199 = scmp.eq.s32.totalorder %s23, 0
        %p200 = scmp.eq.s32.totalorder %s24, 0
        %p201 = pnand %p199, %p200
        %p202 = pneg %p201
        // Predicated region
        $region29: #{tpu_custom_call.1} parent=23 // pred_check
          _
        $region30: #{tpu_custom_call.1} parent=23 // pred_check_branch
          %204 = sbr.rel (%p201) target = $region32
        $region31: #{tpu_custom_call.1} parent=23 // pred_region
          %vm205 = vcmask 7168
          %206 = vst.msk [vmem:[%s194] sm:$0xff] %vm205, 0.0
          %207 = vst.msk [vmem:[%s198] sm:$0xff] %vm205, 0.0
        $region32: #{tpu_custom_call.1} parent=23 // pred_fallthru
          _
        %v208 = vld [vmem:[%s166] sm:$0xff]
        %v209 = vld [vmem:[%s166 + $0x8] sm:$0xff]
        %v210 = vadd.f32 %v208, 0.0
        %v211 = vadd.f32 %v209, 0.0
        %v212 = vmul.f32 %v208, %v208
        %v213 = vmul.f32 %v209, %v209
        %v214 = vadd.f32 %v212, 0.0
        %v215 = vadd.f32 %v213, 0.0
        %v216 = vld [vmem:[%s194] sm:$0xff]
        %v217 = vadd.f32 %v210, %v211
        %218 = vadd.xlane.f32.xlu0 %v217
        %v219 = vpop.xlane.xlu0 %218
        %v220 = vadd.f32 %v216, %v219
        %vm221 = vcmask 7168
        %222 = vst.msk [vmem:[%s194] sm:$0xff] %vm221, %v220
        %v223 = vld [vmem:[%s198] sm:$0xff]
        %v224 = vadd.f32 %v214, %v215
        %225 = vadd.xlane.f32.xlu0 %v224
        %v226 = vpop.xlane.xlu0 %225
        %v227 = vadd.f32 %v223, %v226
        %228 = vst.msk [vmem:[%s198] sm:$0xff] %vm221, %v227
        %p229 = scmp.lt.s32.totalorder %s22, 0
        %s230 = scalar_select %p229, %s22, 0
        %s231 = smul.addr %s230, 8
        %s232 = scalar_lea.vmem %s1, %s231
        %p233 = scmp.lt.s32.totalorder %s22, 0
        %s234 = scalar_select %p233, %s22, 0
        %s235 = smul.addr %s234, 8
        %s236 = scalar_lea.vmem %s2, %s235
        // Predicated region
        $region33: #{tpu_custom_call.1} parent=23 // pred_check
          %p237 = pneg %p84
        $region34: #{tpu_custom_call.1} parent=23 // pred_check_branch
          %239 = sbr.rel (%p237) target = $region36
        $region35: #{tpu_custom_call.1} parent=23 // pred_region
          _
        $region36: #{tpu_custom_call.1} parent=23 // pred_fallthru
          _
        // Predicated region
        $region37: #{tpu_custom_call.1} parent=23 // pred_check
          %p240 = pneg %p110
        $region38: #{tpu_custom_call.1} parent=23 // pred_check_branch
          %242 = sbr.rel (%p240) target = $region40
        $region39: #{tpu_custom_call.1} parent=23 // pred_region
          _
        $region40: #{tpu_custom_call.1} parent=23 // pred_fallthru
          _
        // Predicated region
        $region41: #{tpu_custom_call.1} parent=23 // pred_check
          %p243 = pneg %p84
        $region42: #{tpu_custom_call.1} parent=23 // pred_check_branch
          %245 = sbr.rel (%p243) target = $region44
        $region43: #{tpu_custom_call.1} parent=23 // pred_region
          %p246 = scmp.lt.s32.totalorder %s22, 0
          %s247 = scalar_select %p246, %s22, 0
          %s248 = smul.addr %s247, 8
          %s249 = scalar_lea.vmem %s1, %s248
        $region44: #{tpu_custom_call.1} parent=23 // pred_fallthru
          _
        // Predicated region
        $region45: #{tpu_custom_call.1} parent=23 // pred_check
          %p250 = pneg %p110
        $region46: #{tpu_custom_call.1} parent=23 // pred_check_branch
          %252 = sbr.rel (%p250) target = $region48
        $region47: #{tpu_custom_call.1} parent=23 // pred_region
          %p253 = scmp.lt.s32.totalorder %s22, 0
          %s254 = scalar_select %p253, %s22, 0
          %s255 = smul.addr %s254, 8
          %s256 = scalar_lea.vmem %s2, %s255
        $region48: #{tpu_custom_call.1} parent=23 // pred_fallthru
          _
      $region24: #{tpu_custom_call.1} parent=5 // pred_fallthru
        _
      %p257 = scmp.le.s32.totalorder 2, %s12
      // Predicated region
      $region49: #{tpu_custom_call.1} parent=5 // pred_check
        %p258 = pneg %p257
      $region50: #{tpu_custom_call.1} parent=5 // pred_check_branch
        %260 = sbr.rel (%p258) target = $region52
      $region51: #{tpu_custom_call.1} parent=5 // pred_region
        %s261 = ssub.s32 %s12, 2
      $region52: #{tpu_custom_call.1} parent=5 // pred_fallthru
        _
    $region6: #{tpu_custom_call.1} parent=1 // loop_footer
      %s16 = sadd.s32 1, %s12
    $region7: #{tpu_custom_call.1} parent=1 // loop_footer_branch
      %11 = sbr.rel target = $region3
    $region8: #{tpu_custom_call.1} parent=1 // loop_exit
      _
    %262 = vsyncpa [#allocation3], 1
    %s263 = scalar_lea.sflag [#allocation3], 1
    %264 = vsyncpa %s263, 1

</llo_original>
